<compile_context>
chip_gen: v6e
topology: v6e:2x2x1
jax: 0.10.0
libtpu: 0.0.40
codegen_flags: <defaults>
</compile_context>

<pallas_src>
import jax
import jax.numpy as jnp
from jax.experimental import pallas as pl
from jax.experimental.pallas import tpu as pltpu

N_CONST = 3            # number of constants == number of inputs (len(shape))
C, H, W = 4, 16, 16    # shape[0] = (1, C, H, W)
FEAT = C * H * W       # 1024 = 8 * 128
SUB, LANE = 8, 128     # sublane-dense tile for one (1, C, H, W) tensor


def _concat_const_eval_kernel(c_ref, x_ref, o_ref):
    # c_ref: (N_CONST, 8, 128)  == cat(constants, dim=0) in lane-dense layout (v1)
    # x_ref: (N_CONST, 8, 128)  == stacked inputs
    # v2 = x[0] + x[1] + ... computed ONCE (matches the torch running-add loop).
    v2 = x_ref[0] + x_ref[1]
    for i in range(2, N_CONST):          # static unroll; N_CONST is a Python constant
        v2 = v2 + x_ref[i]
    # Broadcast v2 over the concat axis and add.
    o_ref[...] = c_ref[...] + v2[None, :, :]


def concat_const_eval_forward(constants, xs):
    """constants: list of (1, C, H, W) arrays; xs: list of (1, C, H, W) arrays."""
    assert len(constants) == N_CONST and len(xs) == N_CONST
    # Layout glue only (the concat is a pure layout step): stack everything into
    # sublane-dense (N, 8, 128) slabs. All arithmetic happens inside the kernel.
    c_stack = jnp.stack([c.reshape(SUB, LANE) for c in constants], axis=0)  # (N, 8, 128)
    x_stack = jnp.stack([x.reshape(SUB, LANE) for x in xs], axis=0)         # (N, 8, 128)

    out = pl.pallas_call(
        _concat_const_eval_kernel,
        out_shape=jax.ShapeDtypeStruct((N_CONST, SUB, LANE), c_stack.dtype),
        # No grid: one invocation, full-array blocks resident in VMEM.
        in_specs=[
            pl.BlockSpec((N_CONST, SUB, LANE), lambda: (0, 0, 0)),  # constants (v1)
            pl.BlockSpec((N_CONST, SUB, LANE), lambda: (0, 0, 0)),  # stacked inputs
        ],
        out_specs=pl.BlockSpec((N_CONST, SUB, LANE), lambda: (0, 0, 0)),
    )(c_stack, x_stack)
    return out.reshape(N_CONST, C, H, W)


if __name__ == "__main__":
    key = jax.random.PRNGKey(0)

    # Deterministic "buffers" standing in for the torch constants (seeded in __init__).
    constants = [
        jax.random.uniform(jax.random.fold_in(key, 100 + i), (1, C, H, W),
                           dtype=jnp.float32, minval=-1.0, maxval=1.0)
        for i in range(N_CONST)
    ]
    # Deterministic example inputs x[0..N-1], each of shape shape[i] = (1, C, H, W).
    # NOTE: all xs/constants must share the same (1, C, H, W) shape (as in the test).
    xs = [
        jax.random.uniform(jax.random.fold_in(key, 200 + i), (1, C, H, W),
                           dtype=jnp.float32, minval=-1.0, maxval=1.0)
        for i in range(N_CONST)
    ]

    out = concat_const_eval_forward(constants, xs)
    out = jax.block_until_ready(out)

    # Pure-JAX reference of the torch forward.
    v1 = jnp.concatenate(constants, axis=0)            # (N, C, H, W)
    v2 = xs[0] + xs[1]
    for i in range(2, N_CONST):
        v2 = v2 + xs[i]
    ref = v1 + v2                                       # broadcast over dim 0

    assert out.shape == (N_CONST, C, H, W)
    assert jnp.allclose(out, ref, atol=1e-6, rtol=1e-6), "mismatch vs reference"
    print("KERNEL_OK")
</pallas_src>

<mosaic_0001>
module attributes {stable_mosaic.version = 11 : i64} {
  func.func @_concat_const_eval_kernel(%arg0: memref<3x8x128xf32, #tpu.memory_space<vmem>>, %arg1: memref<3x8x128xf32, #tpu.memory_space<vmem>>, %arg2: memref<3x8x128xf32, #tpu.memory_space<vmem>>) attributes {dimension_semantics = [], scalar_prefetch = 0 : i64, scratch_operands = 0 : i64, tpu.core_type = #tpu.core_type<tc>} {
    %c0 = arith.constant 0 : index
    %c0_0 = arith.constant 0 : index
    %c0_1 = arith.constant 0 : index
    %0 = vector.load %arg1[%c0, %c0_0, %c0_1] : memref<3x8x128xf32, #tpu.memory_space<vmem>>, vector<1x8x128xf32>
    %1 = vector.shape_cast %0 : vector<1x8x128xf32> to vector<8x128xf32>
    %c1 = arith.constant 1 : index
    %c0_2 = arith.constant 0 : index
    %c0_3 = arith.constant 0 : index
    %2 = vector.load %arg1[%c1, %c0_2, %c0_3] : memref<3x8x128xf32, #tpu.memory_space<vmem>>, vector<1x8x128xf32>
    %3 = vector.shape_cast %2 : vector<1x8x128xf32> to vector<8x128xf32>
    %4 = arith.addf %1, %3 : vector<8x128xf32>
    %c2 = arith.constant 2 : index
    %c0_4 = arith.constant 0 : index
    %c0_5 = arith.constant 0 : index
    %5 = vector.load %arg1[%c2, %c0_4, %c0_5] : memref<3x8x128xf32, #tpu.memory_space<vmem>>, vector<1x8x128xf32>
    %6 = vector.shape_cast %5 : vector<1x8x128xf32> to vector<8x128xf32>
    %7 = arith.addf %4, %6 : vector<8x128xf32>
    %c0_6 = arith.constant 0 : index
    %c0_7 = arith.constant 0 : index
    %c0_8 = arith.constant 0 : index
    %8 = vector.load %arg0[%c0_6, %c0_7, %c0_8] : memref<3x8x128xf32, #tpu.memory_space<vmem>>, vector<3x8x128xf32>
    %9 = vector.shape_cast %7 : vector<8x128xf32> to vector<1x8x128xf32>
    %10 = vector.broadcast %9 : vector<1x8x128xf32> to vector<3x8x128xf32>
    %11 = arith.addf %8, %10 : vector<3x8x128xf32>
    %c0_9 = arith.constant 0 : index
    %c0_10 = arith.constant 0 : index
    %c0_11 = arith.constant 0 : index
    %12 = vector.load %arg2[%c0_9, %c0_10, %c0_11] : memref<3x8x128xf32, #tpu.memory_space<vmem>>, vector<3x8x128xf32>
    tpu.vector_store %arg2[%c0_9, %c0_10, %c0_11], %11 {strides = array<i32>} : memref<3x8x128xf32, #tpu.memory_space<vmem>>, vector<3x8x128xf32>,
    return
  }
}

</mosaic_0001>

<llo_original>
// kernel: tpu_custom_call.1
$region0: #{tpu_custom_call.1}
  #allocation0 [shape = 'u32[]', space=smem, size = 0x4, offset = 0x4, fixed_abs, tag = 'smem constant byte address 0x4 - core index']
  #allocation1 [shape = 'u32[144,128]{1,0:T(1,128)}', space=vmem, size = 0x12000, scoped, tag = 'internal scratch']
  %s0 = inlined_call_operand.hbm [shape: f32[3,8,128], index: 0, kind: input, shape index: {}]
  %s1 = inlined_call_operand.hbm [shape: f32[3,8,128], index: 1, kind: input, shape index: {}]
  %s2 = inlined_call_operand.hbm [shape: f32[3,8,128], index: 2, kind: output, shape index: {}]
  %s3 = sld [smem:[#allocation0]]
  $region26: #{tpu_custom_call.1} parent=0
    _
  %s5 = ssub.s32 1, %s3
  %s6 = scalar_select 0, %s5, %s3
  $region1: #{tpu_custom_call.1} parent=0
    #allocation2 [shape = 'u8[12288]{0}', space=vmem, size = 0x3000, scoped, tag = 'input window, operand 0, single buffered']
    #allocation3 [shape = 's32[1]{0}', space=sflag, size = 0x4, scoped, tag = 'scoped memory for tpu_custom_call.1']
    #allocation4 [shape = 's32[1]{0}', space=sflag, size = 0x4, scoped, tag = 'scoped memory for tpu_custom_call.1']
    #allocation5 [shape = 'u8[12288]{0}', space=vmem, size = 0x3000, scoped, tag = 'input window, operand 1, single buffered']
    #allocation6 [shape = 's32[1]{0}', space=sflag, size = 0x4, scoped, tag = 'scoped memory for tpu_custom_call.1']
    #allocation7 [shape = 'u8[12288]{0}', space=vmem, size = 0x3000, scoped, tag = 'output window, operand 0, single buffered']
    %7 = vsyncpa [#allocation3], 0
    %8 = vsyncpa [#allocation6], 0
    %9 = vsyncpa [#allocation4], 0
    // Predicated region
    $region2: #{tpu_custom_call.1} parent=1 // pred_check
      _
    $region3: #{tpu_custom_call.1} parent=1 // pred_check_branch
      %11 = sbr.rel (0) target = $region5
    $region4: #{tpu_custom_call.1} parent=1 // pred_region
      %s13 = ssub.s32 384, 384
      %14 = vsyncadd [#allocation3], %s13
      %s15 = sshll.u32 [#allocation2], 4
      %s16 = int_to_ptr.vmem [resolvable:$true] %s15
      %21 = dma.hbm_to_vmem [thread:$0]  %s0, 384, %s16, [#allocation3], 128, 128, 8
    $region5: #{tpu_custom_call.1} parent=1 // pred_fallthru
      _
    // Predicated region
    $region6: #{tpu_custom_call.1} parent=1 // pred_check
      _
    $region7: #{tpu_custom_call.1} parent=1 // pred_check_branch
      %23 = sbr.rel (0) target = $region9
    $region8: #{tpu_custom_call.1} parent=1 // pred_region
      %s25 = ssub.s32 384, 384
      %26 = vsyncadd [#allocation6], %s25
      %s27 = sshll.u32 [#allocation5], 4
      %s28 = int_to_ptr.vmem [resolvable:$true] %s27
      %33 = dma.hbm_to_vmem [thread:$0]  %s1, 384, %s28, [#allocation6], 128, 128, 8
    $region9: #{tpu_custom_call.1} parent=1 // pred_fallthru
      _
    // Predicated region
    $region10: #{tpu_custom_call.1} parent=1 // pred_check
      _
    $region11: #{tpu_custom_call.1} parent=1 // pred_check_branch
      %35 = sbr.rel (0) target = $region13
    $region12: #{tpu_custom_call.1} parent=1 // pred_region
      %36 = dma.done [#allocation3], 384
    $region13: #{tpu_custom_call.1} parent=1 // pred_fallthru
      _
    // Predicated region
    $region14: #{tpu_custom_call.1} parent=1 // pred_check
      _
    $region15: #{tpu_custom_call.1} parent=1 // pred_check_branch
      %38 = sbr.rel (0) target = $region17
    $region16: #{tpu_custom_call.1} parent=1 // pred_region
      %39 = dma.done [#allocation6], 384
    $region17: #{tpu_custom_call.1} parent=1 // pred_fallthru
      _
    %v40 = vld [vmem:[#allocation5] sm:$0xff]
    %s41 = scalar_lea.vmem [#allocation5], 8
    %v42 = vld [vmem:[%s41] sm:$0xff]
    %v43 = vadd.f32 %v40, %v42
    %s44 = scalar_lea.vmem [#allocation5], 16
    %v45 = vld [vmem:[%s44] sm:$0xff]
    %v46 = vadd.f32 %v43, %v45
    %v47 = vld [vmem:[#allocation2] sm:$0xff]
    %v48 = vld [vmem:[#allocation2 + $0x8] sm:$0xff]
    %v49 = vld [vmem:[#allocation2 + $0x10] sm:$0xff]
    %v50 = vadd.f32 %v47, %v46
    %v51 = vadd.f32 %v48, %v46
    %v52 = vadd.f32 %v49, %v46
    %53 = vst [vmem:[#allocation7] sm:$0xff] %v50
    %54 = vst [vmem:[#allocation7 + $0x8] sm:$0xff] %v51
    %55 = vst [vmem:[#allocation7 + $0x10] sm:$0xff] %v52
    // Predicated region
    $region18: #{tpu_custom_call.1} parent=1 // pred_check
      _
    $region19: #{tpu_custom_call.1} parent=1 // pred_check_branch
      %57 = sbr.rel (0) target = $region21
    $region20: #{tpu_custom_call.1} parent=1 // pred_region
      %s59 = ssub.s32 384, 384
      %60 = vsyncadd [#allocation4], %s59
      %s61 = sshll.u32 [#allocation7], 4
      %s62 = int_to_ptr.vmem [resolvable:$true] %s61
      %67 = dma.vmem_to_hbm [thread:$0]  %s62, 384, %s2, [#allocation4], 128, 128, 8
    $region21: #{tpu_custom_call.1} parent=1 // pred_fallthru
      _
    // Predicated region
    $region22: #{tpu_custom_call.1} parent=1 // pred_check
      _
    $region23: #{tpu_custom_call.1} parent=1 // pred_check_branch
      %69 = sbr.rel (0) target = $region25
    $region24: #{tpu_custom_call.1} parent=1 // pred_region
      %70 = dma.done [#allocation4], 384
    $region25: #{tpu_custom_call.1} parent=1 // pred_fallthru
      _
    %71 = vsyncpa [#allocation3], 1
    %72 = vsyncpa [#allocation6], 1
    %73 = vsyncpa [#allocation4], 1

</llo_original>
